<compile_context>
chip_gen: v7x
topology: tpu7x:2x2x1
jax: 0.10.0
libtpu: 0.0.40
codegen_flags: <defaults>
</compile_context>

<pallas_src>
import functools

import jax
import jax.numpy as jnp
from jax.experimental import pallas as pl
from jax.experimental.pallas import tpu as pltpu

BN_EPS = 1e-5                      # nn.BatchNorm1d default eps
_TARGET_BLOCK_BYTES = 2 * 1024 * 1024   # ~2 MiB input block per grid step


# -----------------------------------------------------------------------------
# Pallas kernel: fused SA forward for a (batch-tile, channel-tile) block.
# -----------------------------------------------------------------------------
def _sa_kernel(x_ref, pw_ref, pv_ref, o_ref, *, approx_recip):
    # x_ref : (TB, Cb, H, W)   activations (native dtype; cast to f32 here)
    # pw_ref: (Cb, 2, H)  f32  [0] = folded BN_w scale, [1] = folded BN_w bias (+Lin bias)
    # pv_ref: (Cb, 3, W)  f32  [0] = fc_w weight row, [1] = folded sum(Wh)*BN_h scale,
    #                          [2] = folded BN_h bias (+Lin bias)
    # o_ref : (TB, Cb, 1, 1)   one scalar per (batch, channel)
    X = x_ref[...].astype(jnp.float32)                       # (TB, Cb, H, W)
    pw = pw_ref[...]
    pv = pv_ref[...]
    sw, bw = pw[:, 0, :], pw[:, 1, :]                        # (Cb, H)
    ww, sh, bh = pv[:, 0, :], pv[:, 1, :], pv[:, 2, :]       # (Cb, W)

    # fc_w: Linear(W -> 1) with the eval-mode BatchNorm1d(H) affine + bias pre-folded.
    a = jnp.sum(X * ww[None, :, None, :], axis=-1)           # (TB, Cb, H)
    a = a * sw[None] + bw[None]
    # softmax over H (dim=1 of the PyTorch module), numerically stable.
    a = a - jnp.max(a, axis=-1, keepdims=True)
    ea = jnp.exp(a)
    p = ea * pl.reciprocal(jnp.sum(ea, axis=-1, keepdims=True), approx=approx_recip)

    # h_weight.repeat + bmm  ==  softmax-weighted sum over H.
    v = jnp.sum(p[..., None] * X, axis=2)                    # (TB, Cb, W)

    # fc_h: all H columns of x_c are identical, so Linear(H->1) == v * sum(Wh);
    # sum(Wh), the Linear bias and the BN(W) affine are pre-folded into sh / bh.
    q = v * sh[None] + bh[None]
    q = q - jnp.max(q, axis=-1, keepdims=True)
    eq = jnp.exp(q)
    s = eq * pl.reciprocal(jnp.sum(eq, axis=-1, keepdims=True), approx=approx_recip)

    # w_weight.repeat + bmm collapses to a single scalar per (batch, channel).
    t = jnp.sum(s * v, axis=-1)                              # (TB, Cb)
    o_ref[...] = t[:, :, None, None].astype(o_ref.dtype)


def _largest_divisor_at_most(n, cap):
    cap = max(1, min(n, cap))
    for d in range(cap, 0, -1):
        if n % d == 0:
            return d
    return 1


# -----------------------------------------------------------------------------
# Wrapper: fold BN / biases at trace time, pack params, launch one pallas_call.
# -----------------------------------------------------------------------------
def sa_forward(params, x, *, batch_tile=None, channel_tile=None, approx_recip=False):
    """x: (B, C, H, W) float32 or bfloat16 -> (B, C, H, W) same dtype (SA.forward)."""
    B, C, H, W = x.shape

    # --- fold fc_w path: eval-mode BN1d(H) + Linear bias into per-(c, h) scale/bias.
    scale_w = params["bn_w_gamma"] / jnp.sqrt(params["bn_w_var"] + BN_EPS)       # (C, H)
    bias_w = (params["bn_w_beta"] - params["bn_w_mean"] * scale_w
              + params["fc_w_bias"][:, None] * scale_w)                          # (C, H)

    # --- fold fc_h path: Linear(H->1) on identical columns == v * sum(Wh); fold that,
    # the Linear bias and eval-mode BN1d(W) into per-(c, w) scale/bias.
    sum_wh = jnp.sum(params["fc_h_weight"], axis=-1)                             # (C,)
    scale_h_bn = params["bn_h_gamma"] / jnp.sqrt(params["bn_h_var"] + BN_EPS)    # (C, W)
    scale_h = sum_wh[:, None] * scale_h_bn                                       # (C, W)
    bias_h = (params["bn_h_beta"] - params["bn_h_mean"] * scale_h_bn
              + params["fc_h_bias"][:, None] * scale_h_bn)                       # (C, W)

    # Pack the five per-channel vectors into two arrays -> 2 param DMAs per step.
    pw = jnp.stack([scale_w, bias_w], axis=1).astype(jnp.float32)                # (C, 2, H)
    pv = jnp.stack([params["fc_w_weight"], scale_h, bias_h],
                   axis=1).astype(jnp.float32)                                   # (C, 3, W)

    # --- tile selection: ~2 MiB input blocks; channels first (keeps param block fixed
    # over the inner batch axis), then batch.  Tiles always divide B / C exactly.
    plane_bytes = H * W * x.dtype.itemsize
    target_planes = max(1, _TARGET_BLOCK_BYTES // plane_bytes)
    if channel_tile is None:
        channel_tile = _largest_divisor_at_most(C, target_planes)
    if batch_tile is None:
        batch_tile = _largest_divisor_at_most(B, max(1, target_planes // channel_tile))
    nc, nb = C // channel_tile, B // batch_tile

    # VMEM budget with headroom: double-buffered blocks + f32 working set; capped so it
    # is safe on v5e/v6e (128 MiB phys) and v7x (64 MiB phys).
    x_block_bytes = batch_tile * channel_tile * plane_bytes
    work_f32_bytes = batch_tile * channel_tile * H * W * 4
    param_bytes = channel_tile * (2 * H + 3 * W) * 4
    vmem_estimate = 2 * (x_block_bytes + param_bytes) + 4 * work_f32_bytes + (2 << 20)
    vmem_limit = int(min(48 << 20, max(vmem_estimate, 16 << 20)))

    kernel = functools.partial(_sa_kernel, approx_recip=approx_recip)

    scalars = pl.pallas_call(
        kernel,
        out_shape=jax.ShapeDtypeStruct((B, C, 1, 1), jnp.float32),
        grid=(nc, nb),
        in_specs=[
            pl.BlockSpec((batch_tile, channel_tile, H, W), lambda ci, bi: (bi, ci, 0, 0)),
            pl.BlockSpec((channel_tile, 2, H), lambda ci, bi: (ci, 0, 0)),
            pl.BlockSpec((channel_tile, 3, W), lambda ci, bi: (ci, 0, 0)),
        ],
        out_specs=pl.BlockSpec((batch_tile, channel_tile, 1, 1),
                               lambda ci, bi: (bi, ci, 0, 0)),
        compiler_params=pltpu.CompilerParams(
            dimension_semantics=("parallel", "parallel"),
            vmem_limit_bytes=vmem_limit,
        ),
    )(x, pw, pv)

    # Broadcast the per-(b, c) scalar to the constant (H, W) plane outside the kernel
    # (fusable by XLA / the consumer; the kernel never writes the redundant plane).
    return jnp.broadcast_to(scalars.astype(x.dtype), (B, C, H, W))


# -----------------------------------------------------------------------------
# Pure-JAX reference (mirrors the PyTorch ops, including repeat + bmm).
# -----------------------------------------------------------------------------
def sa_reference(params, x):
    B, C, H, W = x.shape
    x_perm = jnp.transpose(x, (1, 0, 2, 3))  # (C, B, H, W), like x.permute(1,0,2,3)
    outs = []
    for c in range(C):
        xc = x_perm[c]                                                   # (B, H, W)
        a = xc @ params["fc_w_weight"][c] + params["fc_w_bias"][c]       # (B, H)
        a = ((a - params["bn_w_mean"][c]) / jnp.sqrt(params["bn_w_var"][c] + BN_EPS)
             * params["bn_w_gamma"][c] + params["bn_w_beta"][c])
        p = jax.nn.softmax(a, axis=1)                                    # (B, H)
        hw = jnp.repeat(p[:, None, :], H, axis=1)                        # (B, H, H)
        x_c = jnp.einsum("bij,bjw->biw", hw, xc)                         # (B, H, W)
        x_c = jnp.transpose(x_c, (0, 2, 1))                              # (B, W, H)
        q = x_c @ params["fc_h_weight"][c] + params["fc_h_bias"][c]      # (B, W)
        q = ((q - params["bn_h_mean"][c]) / jnp.sqrt(params["bn_h_var"][c] + BN_EPS)
             * params["bn_h_gamma"][c] + params["bn_h_beta"][c])
        s = jax.nn.softmax(q, axis=1)                                    # (B, W)
        wwt = jnp.repeat(s[:, None, :], W, axis=1)                       # (B, W, W)
        x_out = jnp.einsum("bij,bjh->bih", wwt, x_c)                     # (B, W, H)
        outs.append(jnp.transpose(x_out, (0, 2, 1)))                     # (B, H, W)
    return jnp.stack(outs, axis=1)                                       # (B, C, H, W)


# -----------------------------------------------------------------------------
# Deterministic parameter construction mirroring SA.__init__weight (eval mode).
# -----------------------------------------------------------------------------
def init_sa_params(key, c, h, w):
    k1, k2, k3, k4 = jax.random.split(key, 4)
    return {
        # Linear(W, 1): kaiming_normal fan_in, relu gain -> std = sqrt(2 / W); bias = 0.
        "fc_w_weight": jax.random.normal(k1, (c, w), jnp.float32) * jnp.sqrt(2.0 / w),
        "fc_w_bias": jnp.zeros((c,), jnp.float32),
        # BatchNorm1d(H): weight ~ N(1, 0.02), bias 0, running mean 0, running var 1.
        "bn_w_gamma": 1.0 + 0.02 * jax.random.normal(k2, (c, h), jnp.float32),
        "bn_w_beta": jnp.zeros((c, h), jnp.float32),
        "bn_w_mean": jnp.zeros((c, h), jnp.float32),
        "bn_w_var": jnp.ones((c, h), jnp.float32),
        # Linear(H, 1) and BatchNorm1d(W), same init scheme.
        "fc_h_weight": jax.random.normal(k3, (c, h), jnp.float32) * jnp.sqrt(2.0 / h),
        "fc_h_bias": jnp.zeros((c,), jnp.float32),
        "bn_h_gamma": 1.0 + 0.02 * jax.random.normal(k4, (c, w), jnp.float32),
        "bn_h_beta": jnp.zeros((c, w), jnp.float32),
        "bn_h_mean": jnp.zeros((c, w), jnp.float32),
        "bn_h_var": jnp.ones((c, w), jnp.float32),
    }


# -----------------------------------------------------------------------------
if __name__ == "__main__":
    B, C, H, W = 2, 4, 16, 16  # small shapes; module default hw=[160,160] also works
    key = jax.random.PRNGKey(0)
    pkey, xkey = jax.random.split(key)
    params = init_sa_params(pkey, C, H, W)
    x = jax.random.normal(xkey, (B, C, H, W), jnp.float32)

    ref = sa_reference(params, x)

    # Strict f32 check (exact softmax reciprocal).
    fwd = jax.jit(functools.partial(sa_forward, approx_recip=False))
    out = fwd(params, x)
    jax.block_until_ready(out)
    assert out.shape == (B, C, H, W) and out.dtype == jnp.float32
    max_err = float(jnp.max(jnp.abs(out - ref)))
    assert jnp.allclose(out, ref, atol=2e-4, rtol=2e-4), f"max abs err = {max_err}"

    # bf16 I/O + EUP approximate-reciprocal path (loose tolerance: bf16 input
    # quantization + approximate reciprocal dominate the error here).
    x_bf16 = x.astype(jnp.bfloat16)
    fwd_bf16 = jax.jit(functools.partial(sa_forward, approx_recip=True))
    out_bf16 = fwd_bf16(params, x_bf16)
    jax.block_until_ready(out_bf16)
    assert out_bf16.shape == (B, C, H, W) and out_bf16.dtype == jnp.bfloat16
    out_bf16_f32 = out_bf16.astype(jnp.float32)
    assert bool(jnp.all(jnp.isfinite(out_bf16_f32)))
    assert jnp.allclose(out_bf16_f32, ref, atol=1.5e-1, rtol=1.5e-1), (
        f"bf16 max abs err = {float(jnp.max(jnp.abs(out_bf16_f32 - ref)))}")

    print("KERNEL_OK")
</pallas_src>

<mosaic_0001>
module attributes {stable_mosaic.version = 11 : i64} {
  func.func @_sa_kernel(%arg0: i32, %arg1: i32, %arg2: memref<2x4x16x16xf32, #tpu.memory_space<vmem>>, %arg3: memref<4x2x16xf32, #tpu.memory_space<vmem>>, %arg4: memref<4x3x16xf32, #tpu.memory_space<vmem>>, %arg5: memref<2x4x1x1xf32, #tpu.memory_space<vmem>>) attributes {dimension_semantics = [#tpu.dimension_semantics<parallel>, #tpu.dimension_semantics<parallel>], iteration_bounds = array<i64: 1, 1>, scalar_prefetch = 0 : i64, scratch_operands = 0 : i64, tpu.core_type = #tpu.core_type<tc>, window_params = [{transform_indices = @transform_0, window_bounds = array<i64: 2, 4, 16, 16>}, {transform_indices = @transform_1, window_bounds = array<i64: 4, 2, 16>}, {transform_indices = @transform_2, window_bounds = array<i64: 4, 3, 16>}, {transform_indices = @transform_3, window_bounds = array<i64: 2, 4, 1, 1>}]} {
    %c0 = arith.constant 0 : index
    %c0_0 = arith.constant 0 : index
    %c0_1 = arith.constant 0 : index
    %c0_2 = arith.constant 0 : index
    %0 = vector.load %arg2[%c0, %c0_0, %c0_1, %c0_2] : memref<2x4x16x16xf32, #tpu.memory_space<vmem>>, vector<2x4x16x16xf32>
    %c0_3 = arith.constant 0 : index
    %c0_4 = arith.constant 0 : index
    %c0_5 = arith.constant 0 : index
    %1 = vector.load %arg3[%c0_3, %c0_4, %c0_5] : memref<4x2x16xf32, #tpu.memory_space<vmem>>, vector<4x2x16xf32>
    %c0_6 = arith.constant 0 : index
    %c0_7 = arith.constant 0 : index
    %c0_8 = arith.constant 0 : index
    %2 = vector.load %arg4[%c0_6, %c0_7, %c0_8] : memref<4x3x16xf32, #tpu.memory_space<vmem>>, vector<4x3x16xf32>
    %3 = vector.extract_strided_slice %1 {offsets = [0, 0, 0], sizes = [4, 1, 16], strides = [1, 1, 1]} : vector<4x2x16xf32> to vector<4x1x16xf32>
    %4 = vector.shape_cast %3 : vector<4x1x16xf32> to vector<4x16xf32>
    %5 = vector.extract_strided_slice %1 {offsets = [0, 1, 0], sizes = [4, 1, 16], strides = [1, 1, 1]} : vector<4x2x16xf32> to vector<4x1x16xf32>
    %6 = vector.shape_cast %5 : vector<4x1x16xf32> to vector<4x16xf32>
    %7 = vector.extract_strided_slice %2 {offsets = [0, 0, 0], sizes = [4, 1, 16], strides = [1, 1, 1]} : vector<4x3x16xf32> to vector<4x1x16xf32>
    %8 = vector.shape_cast %7 : vector<4x1x16xf32> to vector<4x16xf32>
    %9 = vector.extract_strided_slice %2 {offsets = [0, 1, 0], sizes = [4, 1, 16], strides = [1, 1, 1]} : vector<4x3x16xf32> to vector<4x1x16xf32>
    %10 = vector.shape_cast %9 : vector<4x1x16xf32> to vector<4x16xf32>
    %11 = vector.extract_strided_slice %2 {offsets = [0, 2, 0], sizes = [4, 1, 16], strides = [1, 1, 1]} : vector<4x3x16xf32> to vector<4x1x16xf32>
    %12 = vector.shape_cast %11 : vector<4x1x16xf32> to vector<4x16xf32>
    %13 = vector.shape_cast %8 : vector<4x16xf32> to vector<1x4x1x16xf32>
    %14 = vector.broadcast %13 : vector<1x4x1x16xf32> to vector<2x4x16x16xf32>
    %15 = arith.mulf %0, %14 : vector<2x4x16x16xf32>
    %cst = arith.constant dense<0.000000e+00> : vector<2x4x16xf32>
    %16 = vector.multi_reduction <add>, %15, %cst [3] : vector<2x4x16x16xf32> to vector<2x4x16xf32>
    %17 = vector.shape_cast %4 : vector<4x16xf32> to vector<1x4x16xf32>
    %18 = vector.broadcast %17 : vector<1x4x16xf32> to vector<2x4x16xf32>
    %19 = arith.mulf %16, %18 : vector<2x4x16xf32>
    %20 = vector.shape_cast %6 : vector<4x16xf32> to vector<1x4x16xf32>
    %21 = vector.broadcast %20 : vector<1x4x16xf32> to vector<2x4x16xf32>
    %22 = arith.addf %19, %21 : vector<2x4x16xf32>
    %cst_9 = arith.constant dense<0xFF800000> : vector<2x4xf32>
    %23 = vector.multi_reduction <maximumf>, %22, %cst_9 [2] : vector<2x4x16xf32> to vector<2x4xf32>
    %24 = vector.shape_cast %23 : vector<2x4xf32> to vector<2x4x1xf32>
    %25 = vector.broadcast %24 : vector<2x4x1xf32> to vector<2x4x16xf32>
    %26 = arith.subf %22, %25 : vector<2x4x16xf32>
    %27 = math.exp %26 : vector<2x4x16xf32>
    %cst_10 = arith.constant dense<0.000000e+00> : vector<2x4xf32>
    %28 = vector.multi_reduction <add>, %27, %cst_10 [2] : vector<2x4x16xf32> to vector<2x4xf32>
    %29 = vector.shape_cast %28 : vector<2x4xf32> to vector<2x4x1xf32>
    %30 = tpu.reciprocal %29 : vector<2x4x1xf32> -> vector<2x4x1xf32>
    %31 = vector.broadcast %30 : vector<2x4x1xf32> to vector<2x4x16xf32>
    %32 = arith.mulf %27, %31 : vector<2x4x16xf32>
    %33 = vector.shape_cast %32 : vector<2x4x16xf32> to vector<2x4x16x1xf32>
    %34 = vector.broadcast %33 : vector<2x4x16x1xf32> to vector<2x4x16x16xf32>
    %35 = arith.mulf %34, %0 : vector<2x4x16x16xf32>
    %cst_11 = arith.constant dense<0.000000e+00> : vector<2x4x16xf32>
    %36 = vector.multi_reduction <add>, %35, %cst_11 [2] : vector<2x4x16x16xf32> to vector<2x4x16xf32>
    %37 = vector.shape_cast %10 : vector<4x16xf32> to vector<1x4x16xf32>
    %38 = vector.broadcast %37 : vector<1x4x16xf32> to vector<2x4x16xf32>
    %39 = arith.mulf %36, %38 : vector<2x4x16xf32>
    %40 = vector.shape_cast %12 : vector<4x16xf32> to vector<1x4x16xf32>
    %41 = vector.broadcast %40 : vector<1x4x16xf32> to vector<2x4x16xf32>
    %42 = arith.addf %39, %41 : vector<2x4x16xf32>
    %cst_12 = arith.constant dense<0xFF800000> : vector<2x4xf32>
    %43 = vector.multi_reduction <maximumf>, %42, %cst_12 [2] : vector<2x4x16xf32> to vector<2x4xf32>
    %44 = vector.shape_cast %43 : vector<2x4xf32> to vector<2x4x1xf32>
    %45 = vector.broadcast %44 : vector<2x4x1xf32> to vector<2x4x16xf32>
    %46 = arith.subf %42, %45 : vector<2x4x16xf32>
    %47 = math.exp %46 : vector<2x4x16xf32>
    %cst_13 = arith.constant dense<0.000000e+00> : vector<2x4xf32>
    %48 = vector.multi_reduction <add>, %47, %cst_13 [2] : vector<2x4x16xf32> to vector<2x4xf32>
    %49 = vector.shape_cast %48 : vector<2x4xf32> to vector<2x4x1xf32>
    %50 = tpu.reciprocal %49 : vector<2x4x1xf32> -> vector<2x4x1xf32>
    %51 = vector.broadcast %50 : vector<2x4x1xf32> to vector<2x4x16xf32>
    %52 = arith.mulf %47, %51 : vector<2x4x16xf32>
    %53 = arith.mulf %52, %36 : vector<2x4x16xf32>
    %cst_14 = arith.constant dense<0.000000e+00> : vector<2x4xf32>
    %54 = vector.multi_reduction <add>, %53, %cst_14 [2] : vector<2x4x16xf32> to vector<2x4xf32>
    %55 = vector.shape_cast %54 : vector<2x4xf32> to vector<2x4x1x1xf32>
    %c0_15 = arith.constant 0 : index
    %c0_16 = arith.constant 0 : index
    %c0_17 = arith.constant 0 : index
    %c0_18 = arith.constant 0 : index
    %56 = vector.load %arg5[%c0_15, %c0_16, %c0_17, %c0_18] : memref<2x4x1x1xf32, #tpu.memory_space<vmem>>, vector<2x4x1x1xf32>
    tpu.vector_store %arg5[%c0_15, %c0_16, %c0_17, %c0_18], %55 {strides = array<i32>} : memref<2x4x1x1xf32, #tpu.memory_space<vmem>>, vector<2x4x1x1xf32>,
    return
  }
  func.func @transform_0(%arg0: i32, %arg1: i32) -> (i32, i32, i32, i32) {
    %c0_i32 = arith.constant 0 : i32
    %c0_i32_0 = arith.constant 0 : i32
    %c0_i32_1 = arith.constant 0 : i32
    return %arg1, %arg0, %c0_i32, %c0_i32_0 : i32, i32, i32, i32
  }
  func.func @transform_1(%arg0: i32, %arg1: i32) -> (i32, i32, i32) {
    %c0_i32 = arith.constant 0 : i32
    %c0_i32_0 = arith.constant 0 : i32
    %c0_i32_1 = arith.constant 0 : i32
    return %arg0, %c0_i32, %c0_i32_0 : i32, i32, i32
  }
  func.func @transform_2(%arg0: i32, %arg1: i32) -> (i32, i32, i32) {
    %c0_i32 = arith.constant 0 : i32
    %c0_i32_0 = arith.constant 0 : i32
    %c0_i32_1 = arith.constant 0 : i32
    return %arg0, %c0_i32, %c0_i32_0 : i32, i32, i32
  }
  func.func @transform_3(%arg0: i32, %arg1: i32) -> (i32, i32, i32, i32) {
    %c0_i32 = arith.constant 0 : i32
    %c0_i32_0 = arith.constant 0 : i32
    %c0_i32_1 = arith.constant 0 : i32
    return %arg1, %arg0, %c0_i32, %c0_i32_0 : i32, i32, i32, i32
  }
}

</mosaic_0001>

<llo_original>
// kernel: sa_forward.1
$region0: #{sa_forward.1}
  #allocation0 [shape = 'u32[]', space=smem, size = 0x4, offset = 0x4, fixed_abs, tag = 'smem constant byte address 0x4 - core index']
  #allocation1 [shape = 'u32[144,128]{1,0:T(1,128)}', space=vmem, size = 0x12000, scoped, tag = 'internal scratch']
  %s0 = inlined_call_operand.vmem [shape: f32[2,4,16,16], index: 0, kind: input, shape index: {}]
  %s1 = inlined_call_operand.vmem [shape: f32[4,2,16], index: 1, kind: input, shape index: {}]
  %s2 = inlined_call_operand.vmem [shape: f32[4,3,16], index: 2, kind: input, shape index: {}]
  %s3 = inlined_call_operand.vmem [shape: f32[2,4,1,1], index: 3, kind: output, shape index: {}]
  %s4 = sld [smem:[#allocation0]]
  $region22: #{sa_forward.1} parent=0
    _
  %s6 = ssub.s32 1, %s4
  %s7 = scalar_select 0, %s6, %s4
  // Predicated region
  $region2: #{sa_forward.1} parent=0 // pred_check
    _
  $region3: #{sa_forward.1} parent=0 // pred_check_branch
    %9 = sbr.rel (0) target = $region5
  $region4: #{sa_forward.1} parent=0 // pred_region
    _
  $region5: #{sa_forward.1} parent=0 // pred_fallthru
    _
  // Predicated region
  $region6: #{sa_forward.1} parent=0 // pred_check
    _
  $region7: #{sa_forward.1} parent=0 // pred_check_branch
    %11 = sbr.rel (0) target = $region9
  $region8: #{sa_forward.1} parent=0 // pred_region
    _
  $region9: #{sa_forward.1} parent=0 // pred_fallthru
    _
  // Predicated region
  $region10: #{sa_forward.1} parent=0 // pred_check
    _
  $region11: #{sa_forward.1} parent=0 // pred_check_branch
    %13 = sbr.rel (0) target = $region13
  $region12: #{sa_forward.1} parent=0 // pred_region
    _
  $region13: #{sa_forward.1} parent=0 // pred_fallthru
    _
  %v14 = vld [vmem:[%s0] sm:$0xff]
  %v15 = vld [vmem:[%s0 + $0x8] sm:$0xff]
  %v16 = vld [vmem:[%s0 + $0x10] sm:$0xff]
  %v17 = vld [vmem:[%s0 + $0x18] sm:$0xff]
  %v18 = vld [vmem:[%s0 + $0x20] sm:$0xff]
  %v19 = vld [vmem:[%s0 + $0x28] sm:$0xff]
  %v20 = vld [vmem:[%s0 + $0x30] sm:$0xff]
  %v21 = vld [vmem:[%s0 + $0x38] sm:$0xff]
  %v22 = vld [vmem:[%s0 + $0x40] sm:$0xff]
  %v23 = vld [vmem:[%s0 + $0x48] sm:$0xff]
  %v24 = vld [vmem:[%s0 + $0x50] sm:$0xff]
  %v25 = vld [vmem:[%s0 + $0x58] sm:$0xff]
  %v26 = vld [vmem:[%s0 + $0x60] sm:$0xff]
  %v27 = vld [vmem:[%s0 + $0x68] sm:$0xff]
  %v28 = vld [vmem:[%s0 + $0x70] sm:$0xff]
  %v29 = vld [vmem:[%s0 + $0x78] sm:$0xff]
  %v30 = vld [vmem:[%s1] sm:$0x3]
  %v31 = vld [vmem:[%s1 + $0x2] sm:$0x3]
  %v32 = vld [vmem:[%s1 + $0x4] sm:$0x3]
  %v33 = vld [vmem:[%s1 + $0x6] sm:$0x3]
  %v34 = vld [vmem:[%s2] sm:$0x7]
  %v35 = vld [vmem:[%s2 + $0x4] sm:$0x7]
  %v36 = vld [vmem:[%s2 + $0x8] sm:$0x7]
  %v37 = vld [vmem:[%s2 + $0xc] sm:$0x7]
  %v38 = vlaneseq
  %v39 = vshrl.u32 %v38, 7
  %v40 = vsub.s32 0, %v39
  %v41 = vrot.slane %v34, %v40
  %v42 = vlaneseq
  %v43 = vshrl.u32 %v42, 7
  %v44 = vsub.s32 0, %v43
  %v45 = vrot.slane %v35, %v44
  %v46 = vlaneseq
  %v47 = vshrl.u32 %v46, 7
  %v48 = vsub.s32 0, %v47
  %v49 = vrot.slane %v36, %v48
  %v50 = vlaneseq
  %v51 = vshrl.u32 %v50, 7
  %v52 = vsub.s32 0, %v51
  %v53 = vrot.slane %v37, %v52
  %v54 = vmul.f32 %v14, %v41
  %v55 = vmul.f32 %v15, %v41
  %v56 = vmul.f32 %v16, %v45
  %v57 = vmul.f32 %v17, %v45
  %v58 = vmul.f32 %v18, %v49
  %v59 = vmul.f32 %v19, %v49
  %v60 = vmul.f32 %v20, %v53
  %v61 = vmul.f32 %v21, %v53
  %v62 = vmul.f32 %v22, %v41
  %v63 = vmul.f32 %v23, %v41
  %v64 = vmul.f32 %v24, %v45
  %v65 = vmul.f32 %v25, %v45
  %v66 = vmul.f32 %v26, %v49
  %v67 = vmul.f32 %v27, %v49
  %v68 = vmul.f32 %v28, %v53
  %v69 = vmul.f32 %v29, %v53
  %vm70 = vcmask 130048
  %v71 = vsel %vm70, %v54, 0.0
  %72 = vadd.xlane.f32.xlu0 %v71
  %v73 = vpop.xlane.xlu0 %72
  %v74 = vsel %vm70, %v55, 0.0
  %75 = vadd.xlane.f32.xlu0 %v74
  %v76 = vpop.xlane.xlu0 %75
  %v77 = vsel %vm70, %v56, 0.0
  %78 = vadd.xlane.f32.xlu0 %v77
  %v79 = vpop.xlane.xlu0 %78
  %v80 = vsel %vm70, %v57, 0.0
  %81 = vadd.xlane.f32.xlu0 %v80
  %v82 = vpop.xlane.xlu0 %81
  %v83 = vsel %vm70, %v58, 0.0
  %84 = vadd.xlane.f32.xlu0 %v83
  %v85 = vpop.xlane.xlu0 %84
  %v86 = vsel %vm70, %v59, 0.0
  %87 = vadd.xlane.f32.xlu0 %v86
  %v88 = vpop.xlane.xlu0 %87
  %v89 = vsel %vm70, %v60, 0.0
  %90 = vadd.xlane.f32.xlu0 %v89
  %v91 = vpop.xlane.xlu0 %90
  %v92 = vsel %vm70, %v61, 0.0
  %93 = vadd.xlane.f32.xlu0 %v92
  %v94 = vpop.xlane.xlu0 %93
  %v95 = vsel %vm70, %v62, 0.0
  %96 = vadd.xlane.f32.xlu0 %v95
  %v97 = vpop.xlane.xlu0 %96
  %v98 = vsel %vm70, %v63, 0.0
  %99 = vadd.xlane.f32.xlu0 %v98
  %v100 = vpop.xlane.xlu0 %99
  %v101 = vsel %vm70, %v64, 0.0
  %102 = vadd.xlane.f32.xlu0 %v101
  %v103 = vpop.xlane.xlu0 %102
  %v104 = vsel %vm70, %v65, 0.0
  %105 = vadd.xlane.f32.xlu0 %v104
  %v106 = vpop.xlane.xlu0 %105
  %v107 = vsel %vm70, %v66, 0.0
  %108 = vadd.xlane.f32.xlu0 %v107
  %v109 = vpop.xlane.xlu0 %108
  %v110 = vsel %vm70, %v67, 0.0
  %111 = vadd.xlane.f32.xlu0 %v110
  %v112 = vpop.xlane.xlu0 %111
  %v113 = vsel %vm70, %v68, 0.0
  %114 = vadd.xlane.f32.xlu0 %v113
  %v115 = vpop.xlane.xlu0 %114
  %v116 = vsel %vm70, %v69, 0.0
  %117 = vadd.xlane.f32.xlu0 %v116
  %v118 = vpop.xlane.xlu0 %117
  %v123 = vlaneseq
  %v124 = vshrl.u32 %v123, 7
  %v125 = vsub.s32 0, %v124
  %v126 = vrot.slane %v30, %v125
  %128 = vbcast.lane.b32.xlu0 %v126, 256
  %v129 = vpop.permute.xlu0 %128
  %s131 = sor.u32 256, 8
  %132 = vbcast.lane.b32.xlu0 %v126, %s131
  %v133 = vpop.permute.xlu0 %132
  %v134 = vlaneseq
  %v135 = vshrl.u32 %v134, 7
  %v136 = vsub.s32 0, %v135
  %v137 = vrot.slane %v31, %v136
  %139 = vbcast.lane.b32.xlu0 %v137, 256
  %v140 = vpop.permute.xlu0 %139
  %s142 = sor.u32 256, 8
  %143 = vbcast.lane.b32.xlu0 %v137, %s142
  %v144 = vpop.permute.xlu0 %143
  %v145 = vlaneseq
  %v146 = vshrl.u32 %v145, 7
  %v147 = vsub.s32 0, %v146
  %v148 = vrot.slane %v32, %v147
  %150 = vbcast.lane.b32.xlu0 %v148, 256
  %v151 = vpop.permute.xlu0 %150
  %s153 = sor.u32 256, 8
  %154 = vbcast.lane.b32.xlu0 %v148, %s153
  %v155 = vpop.permute.xlu0 %154
  %v156 = vlaneseq
  %v157 = vshrl.u32 %v156, 7
  %v158 = vsub.s32 0, %v157
  %v159 = vrot.slane %v33, %v158
  %161 = vbcast.lane.b32.xlu0 %v159, 256
  %v162 = vpop.permute.xlu0 %161
  %s164 = sor.u32 256, 8
  %165 = vbcast.lane.b32.xlu0 %v159, %s164
  %v166 = vpop.permute.xlu0 %165
  %v175 = vmul.f32 %v73, %v129
  %v176 = vmul.f32 %v76, %v133
  %v177 = vmul.f32 %v79, %v140
  %v178 = vmul.f32 %v82, %v144
  %v179 = vmul.f32 %v85, %v151
  %v180 = vmul.f32 %v88, %v155
  %v181 = vmul.f32 %v91, %v162
  %v182 = vmul.f32 %v94, %v166
  %v183 = vmul.f32 %v97, %v129
  %v184 = vmul.f32 %v100, %v133
  %v185 = vmul.f32 %v103, %v140
  %v186 = vmul.f32 %v106, %v144
  %v187 = vmul.f32 %v109, %v151
  %v188 = vmul.f32 %v112, %v155
  %v189 = vmul.f32 %v115, %v162
  %v190 = vmul.f32 %v118, %v166
  %v191 = vlaneseq
  %v192 = vshrl.u32 %v191, 7
  %v193 = vsub.s32 1, %v192
  %v194 = vrot.slane %v30, %v193
  %196 = vbcast.lane.b32.xlu0 %v194, 256
  %v197 = vpop.permute.xlu0 %196
  %s199 = sor.u32 256, 8
  %200 = vbcast.lane.b32.xlu0 %v194, %s199
  %v201 = vpop.permute.xlu0 %200
  %v202 = vlaneseq
  %v203 = vshrl.u32 %v202, 7
  %v204 = vsub.s32 1, %v203
  %v205 = vrot.slane %v31, %v204
  %207 = vbcast.lane.b32.xlu0 %v205, 256
  %v208 = vpop.permute.xlu0 %207
  %s210 = sor.u32 256, 8
  %211 = vbcast.lane.b32.xlu0 %v205, %s210
  %v212 = vpop.permute.xlu0 %211
  %v213 = vlaneseq
  %v214 = vshrl.u32 %v213, 7
  %v215 = vsub.s32 1, %v214
  %v216 = vrot.slane %v32, %v215
  %218 = vbcast.lane.b32.xlu0 %v216, 256
  %v219 = vpop.permute.xlu0 %218
  %s221 = sor.u32 256, 8
  %222 = vbcast.lane.b32.xlu0 %v216, %s221
  %v223 = vpop.permute.xlu0 %222
  %v224 = vlaneseq
  %v225 = vshrl.u32 %v224, 7
  %v226 = vsub.s32 1, %v225
  %v227 = vrot.slane %v33, %v226
  %229 = vbcast.lane.b32.xlu0 %v227, 256
  %v230 = vpop.permute.xlu0 %229
  %s232 = sor.u32 256, 8
  %233 = vbcast.lane.b32.xlu0 %v227, %s232
  %v234 = vpop.permute.xlu0 %233
  %v243 = vadd.f32 %v175, %v197
  %v244 = vadd.f32 %v176, %v201
  %v245 = vadd.f32 %v177, %v208
  %v246 = vadd.f32 %v178, %v212
  %v247 = vadd.f32 %v179, %v219
  %v248 = vadd.f32 %v180, %v223
  %v249 = vadd.f32 %v181, %v230
  %v250 = vadd.f32 %v182, %v234
  %v251 = vadd.f32 %v183, %v197
  %v252 = vadd.f32 %v184, %v201
  %v253 = vadd.f32 %v185, %v208
  %v254 = vadd.f32 %v186, %v212
  %v255 = vadd.f32 %v187, %v219
  %v256 = vadd.f32 %v188, %v223
  %v257 = vadd.f32 %v189, %v230
  %v258 = vadd.f32 %v190, %v234
  %275 = vset.pattern.permute.xlu0 0
  %276 = vperm.xlu0 %275, %v243
  %v277 = vpop.permute.xlu0 %276
  %278 = vset.pattern.permute.xlu0 0
  %279 = vperm.xlu0 %278, %v244
  %v280 = vpop.permute.xlu0 %279
  %281 = vset.pattern.permute.xlu0 0
  %282 = vperm.xlu0 %281, %v245
  %v283 = vpop.permute.xlu0 %282
  %284 = vset.pattern.permute.xlu0 0
  %285 = vperm.xlu0 %284, %v246
  %v286 = vpop.permute.xlu0 %285
  %287 = vset.pattern.permute.xlu0 0
  %288 = vperm.xlu0 %287, %v247
  %v289 = vpop.permute.xlu0 %288
  %290 = vset.pattern.permute.xlu0 0
  %291 = vperm.xlu0 %290, %v248
  %v292 = vpop.permute.xlu0 %291
  %293 = vset.pattern.permute.xlu0 0
  %294 = vperm.xlu0 %293, %v249
  %v295 = vpop.permute.xlu0 %294
  %296 = vset.pattern.permute.xlu0 0
  %297 = vperm.xlu0 %296, %v250
  %v298 = vpop.permute.xlu0 %297
  %299 = vset.pattern.permute.xlu0 0
  %300 = vperm.xlu0 %299, %v251
  %v301 = vpop.permute.xlu0 %300
  %302 = vset.pattern.permute.xlu0 0
  %303 = vperm.xlu0 %302, %v252
  %v304 = vpop.permute.xlu0 %303
  %305 = vset.pattern.permute.xlu0 0
  %306 = vperm.xlu0 %305, %v253
  %v307 = vpop.permute.xlu0 %306
  %308 = vset.pattern.permute.xlu0 0
  %309 = vperm.xlu0 %308, %v254
  %v310 = vpop.permute.xlu0 %309
  %311 = vset.pattern.permute.xlu0 0
  %312 = vperm.xlu0 %311, %v255
  %v313 = vpop.permute.xlu0 %312
  %314 = vset.pattern.permute.xlu0 0
  %315 = vperm.xlu0 %314, %v256
  %v316 = vpop.permute.xlu0 %315
  %317 = vset.pattern.permute.xlu0 0
  %318 = vperm.xlu0 %317, %v257
  %v319 = vpop.permute.xlu0 %318
  %320 = vset.pattern.permute.xlu0 0
  %321 = vperm.xlu0 %320, %v258
  %v322 = vpop.permute.xlu0 %321
  %v323 = vlaneseq
  %v324 = vand.u32 %v323, 127
  %v325 = vlaneseq
  %v326 = vshrl.u32 %v325, 7
  %v327 = vsub.s32 %v324, %v326
  %v328 = vrot.slane %v277, %v327
  %v329 = vadd.s32 %v324, 4294967288
  %v330 = vlaneseq
  %v331 = vshrl.u32 %v330, 7
  %v332 = vsub.s32 %v329, %v331
  %v333 = vrot.slane %v280, %v332
  %vm334 = vcmask 130112
  %v335 = vsel %vm334, %v333, %v328
  %v336 = vlaneseq
  %v337 = vshrl.u32 %v336, 7
  %v338 = vsub.s32 %v324, %v337
  %v339 = vrot.slane %v283, %v338
  %v340 = vlaneseq
  %v341 = vshrl.u32 %v340, 7
  %v342 = vsub.s32 %v329, %v341
  %v343 = vrot.slane %v286, %v342
  %v344 = vsel %vm334, %v343, %v339
  %v345 = vlaneseq
  %v346 = vshrl.u32 %v345, 7
  %v347 = vsub.s32 %v324, %v346
  %v348 = vrot.slane %v289, %v347
  %v349 = vlaneseq
  %v350 = vshrl.u32 %v349, 7
  %v351 = vsub.s32 %v329, %v350
  %v352 = vrot.slane %v292, %v351
  %v353 = vsel %vm334, %v352, %v348
  %v354 = vlaneseq
  %v355 = vshrl.u32 %v354, 7
  %v356 = vsub.s32 %v324, %v355
  %v357 = vrot.slane %v295, %v356
  %v358 = vlaneseq
  %v359 = vshrl.u32 %v358, 7
  %v360 = vsub.s32 %v329, %v359
  %v361 = vrot.slane %v298, %v360
  %v362 = vsel %vm334, %v361, %v357
  %v363 = vlaneseq
  %v364 = vshrl.u32 %v363, 7
  %v365 = vsub.s32 %v324, %v364
  %v366 = vrot.slane %v301, %v365
  %v367 = vlaneseq
  %v368 = vshrl.u32 %v367, 7
  %v369 = vsub.s32 %v329, %v368
  %v370 = vrot.slane %v304, %v369
  %v371 = vsel %vm334, %v370, %v366
  %v372 = vlaneseq
  %v373 = vshrl.u32 %v372, 7
  %v374 = vsub.s32 %v324, %v373
  %v375 = vrot.slane %v307, %v374
  %v376 = vlaneseq
  %v377 = vshrl.u32 %v376, 7
  %v378 = vsub.s32 %v329, %v377
  %v379 = vrot.slane %v310, %v378
  %v380 = vsel %vm334, %v379, %v375
  %v381 = vlaneseq
  %v382 = vshrl.u32 %v381, 7
  %v383 = vsub.s32 %v324, %v382
  %v384 = vrot.slane %v313, %v383
  %v385 = vlaneseq
  %v386 = vshrl.u32 %v385, 7
  %v387 = vsub.s32 %v329, %v386
  %v388 = vrot.slane %v316, %v387
  %v389 = vsel %vm334, %v388, %v384
  %v390 = vlaneseq
  %v391 = vshrl.u32 %v390, 7
  %v392 = vsub.s32 %v324, %v391
  %v393 = vrot.slane %v319, %v392
  %v394 = vlaneseq
  %v395 = vshrl.u32 %v394, 7
  %v396 = vsub.s32 %v329, %v395
  %v397 = vrot.slane %v322, %v396
  %v398 = vsel %vm334, %v397, %v393
  %vm399 = vcmask 1041409
  %v400 = vsel %vm399, %v344, %v335
  %vm401 = vcmask 1042434
  %v402 = vsel %vm401, %v353, %v400
  %vm403 = vcmask 1043459
  %v404 = vsel %vm403, %v362, %v402
  %v405 = vsel %vm399, %v380, %v371
  %v406 = vsel %vm401, %v389, %v405
  %v407 = vsel %vm403, %v398, %v406
  %vm410 = vcmask 125952
  %v411 = vsel %vm410, %v404, -inf
  %412 = vmax.xlane.f32.xlu0 %v411
  %v413 = vpop.xlane.xlu0 %412
  %v414 = vsel %vm410, %v407, -inf
  %415 = vmax.xlane.f32.xlu0 %v414
  %v416 = vpop.xlane.xlu0 %415
  %v419 = vlaneseq
  %v420 = vshrl.u32 %v419, 7
  %v421 = vsub.s32 0, %v420
  %v422 = vrot.slane %v413, %v421
  %v423 = vlaneseq
  %v424 = vshrl.u32 %v423, 7
  %v425 = vsub.s32 1, %v424
  %v426 = vrot.slane %v413, %v425
  %v427 = vlaneseq
  %v428 = vshrl.u32 %v427, 7
  %v429 = vsub.s32 2, %v428
  %v430 = vrot.slane %v413, %v429
  %v431 = vlaneseq
  %v432 = vshrl.u32 %v431, 7
  %v433 = vsub.s32 3, %v432
  %v434 = vrot.slane %v413, %v433
  %v435 = vlaneseq
  %v436 = vshrl.u32 %v435, 7
  %v437 = vsub.s32 0, %v436
  %v438 = vrot.slane %v416, %v437
  %v439 = vlaneseq
  %v440 = vshrl.u32 %v439, 7
  %v441 = vsub.s32 1, %v440
  %v442 = vrot.slane %v416, %v441
  %v443 = vlaneseq
  %v444 = vshrl.u32 %v443, 7
  %v445 = vsub.s32 2, %v444
  %v446 = vrot.slane %v416, %v445
  %v447 = vlaneseq
  %v448 = vshrl.u32 %v447, 7
  %v449 = vsub.s32 3, %v448
  %v450 = vrot.slane %v416, %v449
  %v459 = vsub.f32 %v243, %v422
  %v460 = vsub.f32 %v244, %v422
  %v461 = vsub.f32 %v245, %v426
  %v462 = vsub.f32 %v246, %v426
  %v463 = vsub.f32 %v247, %v430
  %v464 = vsub.f32 %v248, %v430
  %v465 = vsub.f32 %v249, %v434
  %v466 = vsub.f32 %v250, %v434
  %v467 = vsub.f32 %v251, %v438
  %v468 = vsub.f32 %v252, %v438
  %v469 = vsub.f32 %v253, %v442
  %v470 = vsub.f32 %v254, %v442
  %v471 = vsub.f32 %v255, %v446
  %v472 = vsub.f32 %v256, %v446
  %v473 = vsub.f32 %v257, %v450
  %v474 = vsub.f32 %v258, %v450
  %v475 = vmul.f32 %v459, 1.442695
  %v476 = vpow.pop %v475
  %v477 = vmul.f32 %v460, 1.442695
  %v478 = vpow.pop %v477
  %v479 = vmul.f32 %v461, 1.442695
  %v480 = vpow.pop %v479
  %v481 = vmul.f32 %v462, 1.442695
  %v482 = vpow.pop %v481
  %v483 = vmul.f32 %v463, 1.442695
  %v484 = vpow.pop %v483
  %v485 = vmul.f32 %v464, 1.442695
  %v486 = vpow.pop %v485
  %v487 = vmul.f32 %v465, 1.442695
  %v488 = vpow.pop %v487
  %v489 = vmul.f32 %v466, 1.442695
  %v490 = vpow.pop %v489
  %v491 = vmul.f32 %v467, 1.442695
  %v492 = vpow.pop %v491
  %v493 = vmul.f32 %v468, 1.442695
  %v494 = vpow.pop %v493
  %v495 = vmul.f32 %v469, 1.442695
  %v496 = vpow.pop %v495
  %v497 = vmul.f32 %v470, 1.442695
  %v498 = vpow.pop %v497
  %v499 = vmul.f32 %v471, 1.442695
  %v500 = vpow.pop %v499
  %v501 = vmul.f32 %v472, 1.442695
  %v502 = vpow.pop %v501
  %v503 = vmul.f32 %v473, 1.442695
  %v504 = vpow.pop %v503
  %v505 = vmul.f32 %v474, 1.442695
  %v506 = vpow.pop %v505
  %523 = vset.pattern.permute.xlu0 0
  %524 = vperm.xlu0 %523, %v476
  %v525 = vpop.permute.xlu0 %524
  %526 = vset.pattern.permute.xlu0 0
  %527 = vperm.xlu0 %526, %v478
  %v528 = vpop.permute.xlu0 %527
  %529 = vset.pattern.permute.xlu0 0
  %530 = vperm.xlu0 %529, %v480
  %v531 = vpop.permute.xlu0 %530
  %532 = vset.pattern.permute.xlu0 0
  %533 = vperm.xlu0 %532, %v482
  %v534 = vpop.permute.xlu0 %533
  %535 = vset.pattern.permute.xlu0 0
  %536 = vperm.xlu0 %535, %v484
  %v537 = vpop.permute.xlu0 %536
  %538 = vset.pattern.permute.xlu0 0
  %539 = vperm.xlu0 %538, %v486
  %v540 = vpop.permute.xlu0 %539
  %541 = vset.pattern.permute.xlu0 0
  %542 = vperm.xlu0 %541, %v488
  %v543 = vpop.permute.xlu0 %542
  %544 = vset.pattern.permute.xlu0 0
  %545 = vperm.xlu0 %544, %v490
  %v546 = vpop.permute.xlu0 %545
  %547 = vset.pattern.permute.xlu0 0
  %548 = vperm.xlu0 %547, %v492
  %v549 = vpop.permute.xlu0 %548
  %550 = vset.pattern.permute.xlu0 0
  %551 = vperm.xlu0 %550, %v494
  %v552 = vpop.permute.xlu0 %551
  %553 = vset.pattern.permute.xlu0 0
  %554 = vperm.xlu0 %553, %v496
  %v555 = vpop.permute.xlu0 %554
  %556 = vset.pattern.permute.xlu0 0
  %557 = vperm.xlu0 %556, %v498
  %v558 = vpop.permute.xlu0 %557
  %559 = vset.pattern.permute.xlu0 0
  %560 = vperm.xlu0 %559, %v500
  %v561 = vpop.permute.xlu0 %560
  %562 = vset.pattern.permute.xlu0 0
  %563 = vperm.xlu0 %562, %v502
  %v564 = vpop.permute.xlu0 %563
  %565 = vset.pattern.permute.xlu0 0
  %566 = vperm.xlu0 %565, %v504
  %v567 = vpop.permute.xlu0 %566
  %568 = vset.pattern.permute.xlu0 0
  %569 = vperm.xlu0 %568, %v506
  %v570 = vpop.permute.xlu0 %569
  %v571 = vlaneseq
  %v572 = vshrl.u32 %v571, 7
  %v573 = vsub.s32 %v324, %v572
  %v574 = vrot.slane %v525, %v573
  %v575 = vlaneseq
  %v576 = vshrl.u32 %v575, 7
  %v577 = vsub.s32 %v329, %v576
  %v578 = vrot.slane %v528, %v577
  %v579 = vsel %vm334, %v578, %v574
  %v580 = vlaneseq
  %v581 = vshrl.u32 %v580, 7
  %v582 = vsub.s32 %v324, %v581
  %v583 = vrot.slane %v531, %v582
  %v584 = vlaneseq
  %v585 = vshrl.u32 %v584, 7
  %v586 = vsub.s32 %v329, %v585
  %v587 = vrot.slane %v534, %v586
  %v588 = vsel %vm334, %v587, %v583
  %v589 = vlaneseq
  %v590 = vshrl.u32 %v589, 7
  %v591 = vsub.s32 %v324, %v590
  %v592 = vrot.slane %v537, %v591
  %v593 = vlaneseq
  %v594 = vshrl.u32 %v593, 7
  %v595 = vsub.s32 %v329, %v594
  %v596 = vrot.slane %v540, %v595
  %v597 = vsel %vm334, %v596, %v592
  %v598 = vlaneseq
  %v599 = vshrl.u32 %v598, 7
  %v600 = vsub.s32 %v324, %v599
  %v601 = vrot.slane %v543, %v600
  %v602 = vlaneseq
  %v603 = vshrl.u32 %v602, 7
  %v604 = vsub.s32 %v329, %v603
  %v605 = vrot.slane %v546, %v604
  %v606 = vsel %vm334, %v605, %v601
  %v607 = vlaneseq
  %v608 = vshrl.u32 %v607, 7
  %v609 = vsub.s32 %v324, %v608
  %v610 = vrot.slane %v549, %v609
  %v611 = vlaneseq
  %v612 = vshrl.u32 %v611, 7
  %v613 = vsub.s32 %v329, %v612
  %v614 = vrot.slane %v552, %v613
  %v615 = vsel %vm334, %v614, %v610
  %v616 = vlaneseq
  %v617 = vshrl.u32 %v616, 7
  %v618 = vsub.s32 %v324, %v617
  %v619 = vrot.slane %v555, %v618
  %v620 = vlaneseq
  %v621 = vshrl.u32 %v620, 7
  %v622 = vsub.s32 %v329, %v621
  %v623 = vrot.slane %v558, %v622
  %v624 = vsel %vm334, %v623, %v619
  %v625 = vlaneseq
  %v626 = vshrl.u32 %v625, 7
  %v627 = vsub.s32 %v324, %v626
  %v628 = vrot.slane %v561, %v627
  %v629 = vlaneseq
  %v630 = vshrl.u32 %v629, 7
  %v631 = vsub.s32 %v329, %v630
  %v632 = vrot.slane %v564, %v631
  %v633 = vsel %vm334, %v632, %v628
  %v634 = vlaneseq
  %v635 = vshrl.u32 %v634, 7
  %v636 = vsub.s32 %v324, %v635
  %v637 = vrot.slane %v567, %v636
  %v638 = vlaneseq
  %v639 = vshrl.u32 %v638, 7
  %v640 = vsub.s32 %v329, %v639
  %v641 = vrot.slane %v570, %v640
  %v642 = vsel %vm334, %v641, %v637
  %v643 = vsel %vm399, %v588, %v579
  %v644 = vsel %vm401, %v597, %v643
  %v645 = vsel %vm403, %v606, %v644
  %v646 = vsel %vm399, %v624, %v615
  %v647 = vsel %vm401, %v633, %v646
  %v648 = vsel %vm403, %v642, %v647
  %v651 = vsel %vm410, %v645, 0.0
  %652 = vadd.xlane.f32.xlu0 %v651
  %v653 = vpop.xlane.xlu0 %652
  %v654 = vsel %vm410, %v648, 0.0
  %655 = vadd.xlane.f32.xlu0 %v654
  %v656 = vpop.xlane.xlu0 %655
  %v657 = vrcp.pop %v653
  %v658 = vrcp.pop %v656
  %v661 = vlaneseq
  %v662 = vshrl.u32 %v661, 7
  %v663 = vsub.s32 0, %v662
  %v664 = vrot.slane %v657, %v663
  %v665 = vlaneseq
  %v666 = vshrl.u32 %v665, 7
  %v667 = vsub.s32 1, %v666
  %v668 = vrot.slane %v657, %v667
  %v669 = vlaneseq
  %v670 = vshrl.u32 %v669, 7
  %v671 = vsub.s32 2, %v670
  %v672 = vrot.slane %v657, %v671
  %v673 = vlaneseq
  %v674 = vshrl.u32 %v673, 7
  %v675 = vsub.s32 3, %v674
  %v676 = vrot.slane %v657, %v675
  %v677 = vlaneseq
  %v678 = vshrl.u32 %v677, 7
  %v679 = vsub.s32 0, %v678
  %v680 = vrot.slane %v658, %v679
  %v681 = vlaneseq
  %v682 = vshrl.u32 %v681, 7
  %v683 = vsub.s32 1, %v682
  %v684 = vrot.slane %v658, %v683
  %v685 = vlaneseq
  %v686 = vshrl.u32 %v685, 7
  %v687 = vsub.s32 2, %v686
  %v688 = vrot.slane %v658, %v687
  %v689 = vlaneseq
  %v690 = vshrl.u32 %v689, 7
  %v691 = vsub.s32 3, %v690
  %v692 = vrot.slane %v658, %v691
  %v701 = vmul.f32 %v476, %v664
  %v702 = vmul.f32 %v478, %v664
  %v703 = vmul.f32 %v480, %v668
  %v704 = vmul.f32 %v482, %v668
  %v705 = vmul.f32 %v484, %v672
  %v706 = vmul.f32 %v486, %v672
  %v707 = vmul.f32 %v488, %v676
  %v708 = vmul.f32 %v490, %v676
  %v709 = vmul.f32 %v492, %v680
  %v710 = vmul.f32 %v494, %v680
  %v711 = vmul.f32 %v496, %v684
  %v712 = vmul.f32 %v498, %v684
  %v713 = vmul.f32 %v500, %v688
  %v714 = vmul.f32 %v502, %v688
  %v715 = vmul.f32 %v504, %v692
  %v716 = vmul.f32 %v506, %v692
  %718 = vset.pattern.permute.xlu0 0
  %719 = vperm.xlu0 %718, %v701
  %v720 = vpop.permute.xlu0 %719
  %723 = vset.pattern.permute.xlu0 0
  %724 = vperm.xlu0 %723, %v702
  %v725 = vpop.permute.xlu0 %724
  %728 = vset.pattern.permute.xlu0 0
  %729 = vperm.xlu0 %728, %v703
  %v730 = vpop.permute.xlu0 %729
  %733 = vset.pattern.permute.xlu0 0
  %734 = vperm.xlu0 %733, %v704
  %v735 = vpop.permute.xlu0 %734
  %738 = vset.pattern.permute.xlu0 0
  %739 = vperm.xlu0 %738, %v705
  %v740 = vpop.permute.xlu0 %739
  %743 = vset.pattern.permute.xlu0 0
  %744 = vperm.xlu0 %743, %v706
  %v745 = vpop.permute.xlu0 %744
  %748 = vset.pattern.permute.xlu0 0
  %749 = vperm.xlu0 %748, %v707
  %v750 = vpop.permute.xlu0 %749
  %753 = vset.pattern.permute.xlu0 0
  %754 = vperm.xlu0 %753, %v708
  %v755 = vpop.permute.xlu0 %754
  %758 = vset.pattern.permute.xlu0 0
  %759 = vperm.xlu0 %758, %v709
  %v760 = vpop.permute.xlu0 %759
  %763 = vset.pattern.permute.xlu0 0
  %764 = vperm.xlu0 %763, %v710
  %v765 = vpop.permute.xlu0 %764
  %768 = vset.pattern.permute.xlu0 0
  %769 = vperm.xlu0 %768, %v711
  %v770 = vpop.permute.xlu0 %769
  %773 = vset.pattern.permute.xlu0 0
  %774 = vperm.xlu0 %773, %v712
  %v775 = vpop.permute.xlu0 %774
  %778 = vset.pattern.permute.xlu0 0
  %779 = vperm.xlu0 %778, %v713
  %v780 = vpop.permute.xlu0 %779
  %783 = vset.pattern.permute.xlu0 0
  %784 = vperm.xlu0 %783, %v714
  %v785 = vpop.permute.xlu0 %784
  %788 = vset.pattern.permute.xlu0 0
  %789 = vperm.xlu0 %788, %v715
  %v790 = vpop.permute.xlu0 %789
  %793 = vset.pattern.permute.xlu0 0
  %794 = vperm.xlu0 %793, %v716
  %v795 = vpop.permute.xlu0 %794
  %v797 = vmul.f32 %v720, %v14
  %v798 = vmul.f32 %v725, %v15
  %v799 = vmul.f32 %v730, %v16
  %v800 = vmul.f32 %v735, %v17
  %v801 = vmul.f32 %v740, %v18
  %v802 = vmul.f32 %v745, %v19
  %v803 = vmul.f32 %v750, %v20
  %v804 = vmul.f32 %v755, %v21
  %v805 = vmul.f32 %v760, %v22
  %v806 = vmul.f32 %v765, %v23
  %v807 = vmul.f32 %v770, %v24
  %v808 = vmul.f32 %v775, %v25
  %v809 = vmul.f32 %v780, %v26
  %v810 = vmul.f32 %v785, %v27
  %v811 = vmul.f32 %v790, %v28
  %v812 = vmul.f32 %v795, %v29
  %v813 = vsel %vm70, %v797, 0.0
  %v814 = vsel %vm70, %v798, 0.0
  %v815 = vadd.f32 %v813, %v814
  %v816 = vrot.slane %v815, 4
  %v817 = vadd.f32 %v815, %v816
  %v818 = vrot.slane %v817, 2
  %v819 = vadd.f32 %v817, %v818
  %v820 = vrot.slane %v819, 1
  %v821 = vadd.f32 %v819, %v820
  %v822 = vsel %vm70, %v799, 0.0
  %v823 = vsel %vm70, %v800, 0.0
  %v824 = vadd.f32 %v822, %v823
  %v825 = vrot.slane %v824, 4
  %v826 = vadd.f32 %v824, %v825
  %v827 = vrot.slane %v826, 2
  %v828 = vadd.f32 %v826, %v827
  %v829 = vrot.slane %v828, 1
  %v830 = vadd.f32 %v828, %v829
  %v831 = vsel %vm70, %v801, 0.0
  %v832 = vsel %vm70, %v802, 0.0
  %v833 = vadd.f32 %v831, %v832
  %v834 = vrot.slane %v833, 4
  %v835 = vadd.f32 %v833, %v834
  %v836 = vrot.slane %v835, 2
  %v837 = vadd.f32 %v835, %v836
  %v838 = vrot.slane %v837, 1
  %v839 = vadd.f32 %v837, %v838
  %v840 = vsel %vm70, %v803, 0.0
  %v841 = vsel %vm70, %v804, 0.0
  %v842 = vadd.f32 %v840, %v841
  %v843 = vrot.slane %v842, 4
  %v844 = vadd.f32 %v842, %v843
  %v845 = vrot.slane %v844, 2
  %v846 = vadd.f32 %v844, %v845
  %v847 = vrot.slane %v846, 1
  %v848 = vadd.f32 %v846, %v847
  %v849 = vsel %vm70, %v805, 0.0
  %v850 = vsel %vm70, %v806, 0.0
  %v851 = vadd.f32 %v849, %v850
  %v852 = vrot.slane %v851, 4
  %v853 = vadd.f32 %v851, %v852
  %v854 = vrot.slane %v853, 2
  %v855 = vadd.f32 %v853, %v854
  %v856 = vrot.slane %v855, 1
  %v857 = vadd.f32 %v855, %v856
  %v858 = vsel %vm70, %v807, 0.0
  %v859 = vsel %vm70, %v808, 0.0
  %v860 = vadd.f32 %v858, %v859
  %v861 = vrot.slane %v860, 4
  %v862 = vadd.f32 %v860, %v861
  %v863 = vrot.slane %v862, 2
  %v864 = vadd.f32 %v862, %v863
  %v865 = vrot.slane %v864, 1
  %v866 = vadd.f32 %v864, %v865
  %v867 = vsel %vm70, %v809, 0.0
  %v868 = vsel %vm70, %v810, 0.0
  %v869 = vadd.f32 %v867, %v868
  %v870 = vrot.slane %v869, 4
  %v871 = vadd.f32 %v869, %v870
  %v872 = vrot.slane %v871, 2
  %v873 = vadd.f32 %v871, %v872
  %v874 = vrot.slane %v873, 1
  %v875 = vadd.f32 %v873, %v874
  %v876 = vsel %vm70, %v811, 0.0
  %v877 = vsel %vm70, %v812, 0.0
  %v878 = vadd.f32 %v876, %v877
  %v879 = vrot.slane %v878, 4
  %v880 = vadd.f32 %v878, %v879
  %v881 = vrot.slane %v880, 2
  %v882 = vadd.f32 %v880, %v881
  %v883 = vrot.slane %v882, 1
  %v884 = vadd.f32 %v882, %v883
  %v885 = vmul.f32 %v821, %v34
  %v886 = vmul.f32 %v830, %v35
  %v887 = vmul.f32 %v839, %v36
  %v888 = vmul.f32 %v848, %v37
  %v889 = vmul.f32 %v857, %v34
  %v890 = vmul.f32 %v866, %v35
  %v891 = vmul.f32 %v875, %v36
  %v892 = vmul.f32 %v884, %v37
  %v897 = vrot.slane %v34, 1
  %v898 = vrot.slane %v35, 1
  %v899 = vrot.slane %v36, 1
  %v900 = vrot.slane %v37, 1
  %v905 = vadd.f32 %v885, %v897
  %v906 = vadd.f32 %v886, %v898
  %v907 = vadd.f32 %v887, %v899
  %v908 = vadd.f32 %v888, %v900
  %v909 = vadd.f32 %v889, %v897
  %v910 = vadd.f32 %v890, %v898
  %v911 = vadd.f32 %v891, %v899
  %v912 = vadd.f32 %v892, %v900
  %v921 = vrot.slane %v906, 7
  %v922 = vsel %vm401, %v921, %v905
  %v923 = vrot.slane %v907, 6
  %v924 = vsel %vm403, %v923, %v922
  %v925 = vrot.slane %v908, 5
  %vm926 = vcmask 1044484
  %v927 = vsel %vm926, %v925, %v924
  %v928 = vrot.slane %v910, 7
  %v929 = vsel %vm401, %v928, %v909
  %v930 = vrot.slane %v911, 6
  %v931 = vsel %vm403, %v930, %v929
  %v932 = vrot.slane %v912, 5
  %v933 = vsel %vm926, %v932, %v931
  %vm936 = vcmask 126977
  %v937 = vsel %vm936, %v927, -inf
  %938 = vmax.xlane.f32.xlu0 %v937
  %v939 = vpop.xlane.xlu0 %938
  %v940 = vsel %vm936, %v933, -inf
  %941 = vmax.xlane.f32.xlu0 %v940
  %v942 = vpop.xlane.xlu0 %941
  %v945 = vrot.slane %v939, 1
  %v946 = vrot.slane %v939, 2
  %v947 = vrot.slane %v939, 3
  %v948 = vrot.slane %v942, 1
  %v949 = vrot.slane %v942, 2
  %v950 = vrot.slane %v942, 3
  %v959 = vsub.f32 %v905, %v939
  %v960 = vsub.f32 %v906, %v945
  %v961 = vsub.f32 %v907, %v946
  %v962 = vsub.f32 %v908, %v947
  %v963 = vsub.f32 %v909, %v942
  %v964 = vsub.f32 %v910, %v948
  %v965 = vsub.f32 %v911, %v949
  %v966 = vsub.f32 %v912, %v950
  %v967 = vmul.f32 %v959, 1.442695
  %v968 = vpow.pop %v967
  %v969 = vmul.f32 %v960, 1.442695
  %v970 = vpow.pop %v969
  %v971 = vmul.f32 %v961, 1.442695
  %v972 = vpow.pop %v971
  %v973 = vmul.f32 %v962, 1.442695
  %v974 = vpow.pop %v973
  %v975 = vmul.f32 %v963, 1.442695
  %v976 = vpow.pop %v975
  %v977 = vmul.f32 %v964, 1.442695
  %v978 = vpow.pop %v977
  %v979 = vmul.f32 %v965, 1.442695
  %v980 = vpow.pop %v979
  %v981 = vmul.f32 %v966, 1.442695
  %v982 = vpow.pop %v981
  %v991 = vrot.slane %v970, 7
  %v992 = vsel %vm401, %v991, %v968
  %v993 = vrot.slane %v972, 6
  %v994 = vsel %vm403, %v993, %v992
  %v995 = vrot.slane %v974, 5
  %v996 = vsel %vm926, %v995, %v994
  %v997 = vrot.slane %v978, 7
  %v998 = vsel %vm401, %v997, %v976
  %v999 = vrot.slane %v980, 6
  %v1000 = vsel %vm403, %v999, %v998
  %v1001 = vrot.slane %v982, 5
  %v1002 = vsel %vm926, %v1001, %v1000
  %v1005 = vsel %vm936, %v996, 0.0
  %1006 = vadd.xlane.f32.xlu0 %v1005
  %v1007 = vpop.xlane.xlu0 %1006
  %v1008 = vsel %vm936, %v1002, 0.0
  %1009 = vadd.xlane.f32.xlu0 %v1008
  %v1010 = vpop.xlane.xlu0 %1009
  %v1011 = vrcp.pop %v1007
  %v1012 = vrcp.pop %v1010
  %v1015 = vrot.slane %v1011, 1
  %v1016 = vrot.slane %v1011, 2
  %v1017 = vrot.slane %v1011, 3
  %v1018 = vrot.slane %v1012, 1
  %v1019 = vrot.slane %v1012, 2
  %v1020 = vrot.slane %v1012, 3
  %v1029 = vmul.f32 %v968, %v1011
  %v1030 = vmul.f32 %v970, %v1015
  %v1031 = vmul.f32 %v972, %v1016
  %v1032 = vmul.f32 %v974, %v1017
  %v1033 = vmul.f32 %v976, %v1012
  %v1034 = vmul.f32 %v978, %v1018
  %v1035 = vmul.f32 %v980, %v1019
  %v1036 = vmul.f32 %v982, %v1020
  %v1037 = vmul.f32 %v1029, %v821
  %v1038 = vmul.f32 %v1030, %v830
  %v1039 = vmul.f32 %v1031, %v839
  %v1040 = vmul.f32 %v1032, %v848
  %v1041 = vmul.f32 %v1033, %v857
  %v1042 = vmul.f32 %v1034, %v866
  %v1043 = vmul.f32 %v1035, %v875
  %v1044 = vmul.f32 %v1036, %v884
  %v1053 = vrot.slane %v1038, 7
  %v1054 = vsel %vm401, %v1053, %v1037
  %v1055 = vrot.slane %v1039, 6
  %v1056 = vsel %vm403, %v1055, %v1054
  %v1057 = vrot.slane %v1040, 5
  %v1058 = vsel %vm926, %v1057, %v1056
  %v1059 = vrot.slane %v1042, 7
  %v1060 = vsel %vm401, %v1059, %v1041
  %v1061 = vrot.slane %v1043, 6
  %v1062 = vsel %vm403, %v1061, %v1060
  %v1063 = vrot.slane %v1044, 5
  %v1064 = vsel %vm926, %v1063, %v1062
  %v1067 = vsel %vm936, %v1058, 0.0
  %1068 = vadd.xlane.f32.xlu0 %v1067
  %v1069 = vpop.xlane.xlu0 %1068
  %v1070 = vsel %vm936, %v1064, 0.0
  %1071 = vadd.xlane.f32.xlu0 %v1070
  %v1072 = vpop.xlane.xlu0 %1071
  %v1075 = vlaneseq
  %v1076 = vshrl.u32 %v1075, 7
  %v1077 = vsub.s32 1, %v1076
  %v1078 = vrot.slane %v1069, %v1077
  %v1079 = vlaneseq
  %v1080 = vshrl.u32 %v1079, 7
  %v1081 = vsub.s32 2, %v1080
  %v1082 = vrot.slane %v1069, %v1081
  %v1083 = vlaneseq
  %v1084 = vshrl.u32 %v1083, 7
  %v1085 = vsub.s32 3, %v1084
  %v1086 = vrot.slane %v1069, %v1085
  %v1087 = vlaneseq
  %v1088 = vshrl.u32 %v1087, 7
  %v1089 = vsub.s32 4, %v1088
  %v1090 = vrot.slane %v1069, %v1089
  %v1091 = vlaneseq
  %v1092 = vshrl.u32 %v1091, 7
  %v1093 = vsub.s32 1, %v1092
  %v1094 = vrot.slane %v1072, %v1093
  %v1095 = vlaneseq
  %v1096 = vshrl.u32 %v1095, 7
  %v1097 = vsub.s32 2, %v1096
  %v1098 = vrot.slane %v1072, %v1097
  %v1099 = vlaneseq
  %v1100 = vshrl.u32 %v1099, 7
  %v1101 = vsub.s32 3, %v1100
  %v1102 = vrot.slane %v1072, %v1101
  %v1103 = vlaneseq
  %v1104 = vshrl.u32 %v1103, 7
  %v1105 = vsub.s32 4, %v1104
  %v1106 = vrot.slane %v1072, %v1105
  %vm1115 = vcmask 0
  %1116 = vst.msk [vmem:[%s3] sm:$0x1] %vm1115, %v1078
  %1117 = vst.msk [vmem:[%s3 + $0x1] sm:$0x1] %vm1115, %v1082
  %1118 = vst.msk [vmem:[%s3 + $0x2] sm:$0x1] %vm1115, %v1086
  %1119 = vst.msk [vmem:[%s3 + $0x3] sm:$0x1] %vm1115, %v1090
  %1120 = vst.msk [vmem:[%s3 + $0x4] sm:$0x1] %vm1115, %v1094
  %1121 = vst.msk [vmem:[%s3 + $0x5] sm:$0x1] %vm1115, %v1098
  %1122 = vst.msk [vmem:[%s3 + $0x6] sm:$0x1] %vm1115, %v1102
  %1123 = vst.msk [vmem:[%s3 + $0x7] sm:$0x1] %vm1115, %v1106
  // Predicated region
  $region14: #{sa_forward.1} parent=0 // pred_check
    _
  $region15: #{sa_forward.1} parent=0 // pred_check_branch
    %1125 = sbr.rel (0) target = $region17
  $region16: #{sa_forward.1} parent=0 // pred_region
    _
  $region17: #{sa_forward.1} parent=0 // pred_fallthru
    _
  // Predicated region
  $region18: #{sa_forward.1} parent=0 // pred_check
    _
  $region19: #{sa_forward.1} parent=0 // pred_check_branch
    %1127 = sbr.rel (0) target = $region21
  $region20: #{sa_forward.1} parent=0 // pred_region
    _
  $region21: #{sa_forward.1} parent=0 // pred_fallthru
    _

</llo_original>
